<compile_context>
chip_gen: v5e
topology: v5e:2x2
jax: 0.10.0
libtpu: 0.0.40
codegen_flags: <defaults>
</compile_context>

<pallas_src>
import functools

import jax
import jax.numpy as jnp
from jax.experimental import pallas as pl
from jax.experimental.pallas import tpu as pltpu


def _round_up(x, m):
    return ((x + m - 1) // m) * m


def patch_embed_kernel(x_ref, w_ref, b_ref, o_ref):
    # x_ref: (Mb, pack*P)      bf16  — `pack` consecutive tokens per (lane-dense) row
    # w_ref: (pack*P, pack*E)  bf16  — block-diagonal projection weight (transposed)
    # b_ref: (Mb, pack*E)      f32   — pos table (+cls folded into token 0), packed/tiled
    # o_ref: (Mb, pack*E)      f32   — 128-lane, unmasked store at E=32
    o_ref[...] = jnp.dot(x_ref[...], w_ref[...],
                         preferred_element_type=jnp.float32) + b_ref[...]


def _padded_bytes(rows, cols, itemsize):
    """Bytes a (rows, cols) VMEM block really occupies after (8|16, 128) tiling."""
    sub = 8 if itemsize >= 4 else 16
    return _round_up(rows, sub) * _round_up(cols, 128) * itemsize


def _choose_block_rows(mp_rows, p_cols, e_cols):
    """Packed rows per grid step (overhead-, VMEM- and MXU-alignment aware)."""
    # 12 MiB fits v5e's 16 MiB scoped-VMEM default and is conservative on
    # v6e (32 MiB scoped) and v7x (64 MiB physical).
    # TODO(synk): per-generation budget via pltpu.get_tpu_info() when tuning at scale.
    budget = 12 * 1024 * 1024

    def vmem_bytes(rows):
        inp = 2 * _padded_bytes(rows, p_cols, 2)     # bf16 patches, double-buffered
        out = 2 * _padded_bytes(rows, e_cols, 4)     # f32 output, double-buffered
        bias = 2 * _padded_bytes(rows, e_cols, 4)    # f32 bias, double-buffered
        wgt = 2 * _padded_bytes(p_cols, e_cols, 2)   # weight (constant index map)
        return inp + out + bias + wgt

    # Prefer ONE grid step: per-step overhead (~0.35 us) dominates until a step
    # carries several hundred MXU rows.
    if mp_rows <= 1024 and vmem_bytes(mp_rows) <= budget:
        return mp_rows
    # Otherwise pick the largest divisor that fits the budget, preferring
    # 64-packed-row (= 256-unpacked-row) alignment for the v6e/v7x MXU.
    best = None
    for cand in range(8, min(mp_rows, 4096) + 1, 8):
        if mp_rows % cand or vmem_bytes(cand) > budget:
            continue
        key = (cand % 64 == 0, cand)
        if best is None or key > best:
            best = key
    return best[1] if best is not None else mp_rows


@functools.partial(jax.jit, static_argnames=("patch_size", "token_len"))
def patch_embedding_forward(x, weight, cls_token, pos_table, patch_size, token_len):
    """x: (B, C, H, W) f32 (NCHW, like PyTorch). weight: (E, P). Returns (B, token_len+1, E) f32."""
    B, C, H, W = x.shape
    ph, pw = patch_size
    gh, gw = H // ph, W // pw
    N = gh * gw
    P = ph * pw * C
    E = weight.shape[0]
    T = token_len
    assert T >= N, "token_len must be >= number of patches"
    assert weight.shape == (E, P)

    # tokens packed per 128-lane output row (lane-dense store); 1 for real ViT dims
    pack = 128 // E if (E < 128 and 128 % E == 0) else 1
    pack = min(pack, 8)
    Tpad = _round_up(T + 1, max(8, pack))      # 17 -> 24 at pack=4

    # --- patchify: (B,C,H,W) -> (B,N,P), per-patch order (ph, pw, C), n = i*gw + j ---
    p = x.reshape(B, C, gh, ph, gw, pw).transpose(0, 2, 4, 3, 5, 1).reshape(B, N, P)
    p = p.astype(jnp.bfloat16)                 # MXU feed; f32 accumulate in-kernel
    # one fused pad: cls zero-row + (T - N) zero tokens + alignment pad
    p = jax.lax.pad(p, jnp.bfloat16(0),
                    [(0, 0, 0), (1, Tpad - 1 - N, 0), (0, 0, 0)])      # (B, Tpad, P)

    # free row-major collapse + token lane-pack: (B, Tpad, P) -> (Mp, pack*P)
    Mp = (B * Tpad) // pack
    Pp = pack * P
    Ep = pack * E
    p2 = p.reshape(Mp, Pp)

    # block-diagonal weight: each packed token lands in its own E-wide lane slice
    w_t = weight.T.astype(jnp.bfloat16)                                 # (P, E)
    eye = jnp.eye(pack, dtype=jnp.bfloat16)
    w_blk = (eye[:, None, :, None] * w_t[None, :, None, :]).reshape(Pp, Ep)

    # positional table with cls folded into row 0; padded, lane-packed, tiled per batch
    bias = pos_table.astype(jnp.float32).at[0].add(
        cls_token.reshape(E).astype(jnp.float32))                       # (T+1, E)
    bias = jnp.pad(bias, ((0, Tpad - (T + 1)), (0, 0)))                 # (Tpad, E)
    bias = jnp.tile(bias.reshape(Tpad // pack, Ep), (B, 1))             # (Mp, Ep)
    # TODO(synk): at real ViT sizes keep the bias resident as (Tpad//pack, Ep)
    # instead of batch-tiling it (tiling adds an HBM read ~= output size).

    rows_blk = _choose_block_rows(Mp, Pp, Ep)
    grid = (Mp // rows_blk,)

    cost = pl.CostEstimate(
        flops=2 * Mp * Pp * Ep,
        transcendentals=0,
        bytes_accessed=Mp * Pp * 2 + Pp * Ep * 2 + 2 * Mp * Ep * 4,
    )

    out = pl.pallas_call(
        patch_embed_kernel,
        out_shape=jax.ShapeDtypeStruct((Mp, Ep), jnp.float32),
        grid=grid,
        in_specs=[
            pl.BlockSpec((rows_blk, Pp), lambda m: (m, 0)),
            # constant index map -> fetched once across grid steps; at real ViT
            # sizes (P=E=768) mark this pl.Buffered(1) / hoist to scratch to
            # reclaim its double-buffer VMEM.
            pl.BlockSpec((Pp, Ep), lambda m: (0, 0)),
            pl.BlockSpec((rows_blk, Ep), lambda m: (m, 0)),
        ],
        out_specs=pl.BlockSpec((rows_blk, Ep), lambda m: (m, 0)),
        # Row blocks are independent, but only CORE_PARALLEL / core_map reliably
        # shards across TensorCores and it only pays at >= ~256 rows per core —
        # never reached at these shapes, so keep everything on one core.
        compiler_params=pltpu.CompilerParams(dimension_semantics=("arbitrary",)),
        cost_estimate=cost,
    )(p2, w_blk, bias)

    # free metadata reshape back to (B, token_len+1, E)
    return out.reshape(B, Tpad, E)[:, :T + 1, :]


def reference_forward(x, weight, cls_token, pos_table, patch_size, token_len,
                      bf16_matmul=False):
    """Pure-JAX mirror of the PyTorch forward (validation)."""
    B, C, H, W = x.shape
    ph, pw = patch_size
    gh, gw = H // ph, W // pw
    p = x.reshape(B, C, gh, ph, gw, pw).transpose(0, 2, 4, 3, 5, 1)
    p = p.reshape(B, gh * gw, ph * pw * C)
    if token_len > gh * gw:
        p = jnp.concatenate(
            [p, jnp.zeros((B, token_len - gh * gw, p.shape[-1]), p.dtype)], axis=1)
    if bf16_matmul:
        y = jnp.dot(p.astype(jnp.bfloat16), weight.T.astype(jnp.bfloat16),
                    preferred_element_type=jnp.float32)
    else:
        y = p @ weight.T
    cls_b = jnp.broadcast_to(cls_token.reshape(1, 1, -1), (B, 1, weight.shape[0]))
    y = jnp.concatenate([cls_b, y], axis=1)
    return y + pos_table[None]


if __name__ == "__main__":
    # module config: channels=4, im_size=[16,16], patch_size=4, embedd_dim=32,
    # token_len=None -> token_len = patch_num = 16
    B, C, H, W = 2, 4, 16, 16
    ph = pw = 4
    E = 32
    gh, gw = H // ph, W // pw
    token_len = gh * gw          # 16
    P = ph * pw * C              # 64

    key = jax.random.PRNGKey(0)
    kx, kw, kc = jax.random.split(key, 3)
    x = jax.random.normal(kx, (B, C, H, W), jnp.float32)
    # nn.Linear(P, E, bias=False) weight: (E, P); deterministic init
    weight = jax.random.normal(kw, (E, P), jnp.float32) / jnp.sqrt(float(P))
    # nn.Parameter(torch.rand([1, 1, E]))
    cls_token = jax.random.uniform(kc, (1, 1, E), jnp.float32)

    # TODO(synk): PositionalEncode source not provided; assumed to be an additive
    # sinusoidal table of shape [token_len + 1, embedd_dim].
    pos = jnp.arange(token_len + 1, dtype=jnp.float32)[:, None]
    dim = jnp.arange(E, dtype=jnp.float32)[None, :]
    angle = pos / jnp.power(10000.0, (2.0 * jnp.floor(dim / 2.0)) / E)
    pos_table = jnp.where((jnp.arange(E)[None, :] % 2) == 0,
                          jnp.sin(angle), jnp.cos(angle)).astype(jnp.float32)

    out = patch_embedding_forward(x, weight, cls_token, pos_table,
                                  (ph, pw), token_len)
    out = jax.block_until_ready(out)

    ref_bf16 = reference_forward(x, weight, cls_token, pos_table, (ph, pw),
                                 token_len, bf16_matmul=True)
    ref_f32 = reference_forward(x, weight, cls_token, pos_table, (ph, pw),
                                token_len, bf16_matmul=False)

    assert out.shape == (B, token_len + 1, E), out.shape
    # tight vs a bf16-matmul reference (same rounding of inputs, f32 accumulate)
    assert jnp.allclose(out, ref_bf16, atol=1e-3, rtol=1e-3), "mismatch vs bf16 reference"
    # loose sanity vs the pure-f32 PyTorch-equivalent reference
    assert jnp.allclose(out, ref_f32, atol=5e-2, rtol=5e-2), "mismatch vs f32 reference"

    print("KERNEL_OK")
</pallas_src>

<mosaic_0001>
module attributes {stable_mosaic.version = 11 : i64} {
  func.func @patch_embed_kernel(%arg0: i32, %arg1: memref<12x256xbf16, #tpu.memory_space<vmem>>, %arg2: memref<256x128xbf16, #tpu.memory_space<vmem>>, %arg3: memref<12x128xf32, #tpu.memory_space<vmem>>, %arg4: memref<12x128xf32, #tpu.memory_space<vmem>>) attributes {dimension_semantics = [#tpu.dimension_semantics<arbitrary>], iteration_bounds = array<i64: 1>, scalar_prefetch = 0 : i64, scratch_operands = 0 : i64, tpu.core_type = #tpu.core_type<tc>, window_params = [{transform_indices = @transform_0, window_bounds = array<i64: 12, 256>}, {pipeline_mode = #tpu.pipeline_mode<synchronous>, transform_indices = @transform_1, window_bounds = array<i64: 256, 128>}, {transform_indices = @transform_2, window_bounds = array<i64: 12, 128>}, {transform_indices = @transform_3, window_bounds = array<i64: 12, 128>}]} {
    %c0 = arith.constant 0 : index
    %c0_0 = arith.constant 0 : index
    %0 = vector.load %arg1[%c0, %c0_0] : memref<12x256xbf16, #tpu.memory_space<vmem>>, vector<12x256xbf16>
    %c0_1 = arith.constant 0 : index
    %c0_2 = arith.constant 0 : index
    %1 = vector.load %arg2[%c0_1, %c0_2] : memref<256x128xbf16, #tpu.memory_space<vmem>>, vector<256x128xbf16>
    %cst = arith.constant dense<0.000000e+00> : vector<12x128xf32>
    %2 = tpu.matmul %0, %1, %cst {dimension_numbers = #tpu.dot_dimension_numbers<[1], [0], [0], [1], [0, 0, 1, 1], [], []>} : vector<12x256xbf16>, vector<256x128xbf16>, vector<12x128xf32> -> vector<12x128xf32>
    %c0_3 = arith.constant 0 : index
    %c0_4 = arith.constant 0 : index
    %3 = vector.load %arg3[%c0_3, %c0_4] : memref<12x128xf32, #tpu.memory_space<vmem>>, vector<12x128xf32>
    %4 = arith.addf %2, %3 : vector<12x128xf32>
    %c0_5 = arith.constant 0 : index
    %c0_6 = arith.constant 0 : index
    %5 = vector.load %arg4[%c0_5, %c0_6] : memref<12x128xf32, #tpu.memory_space<vmem>>, vector<12x128xf32>
    tpu.vector_store %arg4[%c0_5, %c0_6], %4 {strides = array<i32>} : memref<12x128xf32, #tpu.memory_space<vmem>>, vector<12x128xf32>,
    return
  }
  func.func @transform_0(%arg0: i32) -> (i32, i32) {
    %c0_i32 = arith.constant 0 : i32
    %c0_i32_0 = arith.constant 0 : i32
    return %arg0, %c0_i32 : i32, i32
  }
  func.func @transform_1(%arg0: i32) -> (i32, i32) {
    %c0_i32 = arith.constant 0 : i32
    %c0_i32_0 = arith.constant 0 : i32
    %c0_i32_1 = arith.constant 0 : i32
    return %c0_i32, %c0_i32_0 : i32, i32
  }
  func.func @transform_2(%arg0: i32) -> (i32, i32) {
    %c0_i32 = arith.constant 0 : i32
    %c0_i32_0 = arith.constant 0 : i32
    return %arg0, %c0_i32 : i32, i32
  }
  func.func @transform_3(%arg0: i32) -> (i32, i32) {
    %c0_i32 = arith.constant 0 : i32
    %c0_i32_0 = arith.constant 0 : i32
    return %arg0, %c0_i32 : i32, i32
  }
}

</mosaic_0001>

<llo_original>
// kernel: tile.7
$region0: #{tile.7}
  %s0 = inlined_call_operand.vmem [shape: f32[2,6,128], index: 0, kind: input, shape index: {}]
  %s1 = inlined_call_operand.vmem [shape: f32[12,128], index: 1, kind: output, shape index: {}]
  %v2 = vld [vmem:[%s0] sm:$0x3f]
  %3 = vst [vmem:[%s1] sm:$0x3f] %v2
  %s4 = scalar_lea.vmem %s0, 8
  %v5 = vld [vmem:[%s4] sm:$0x3f]
  %s6 = scalar_lea.vmem %s1, 6
  %7 = vst [vmem:[%s6] sm:$0x3f] %v5

// kernel: patch_embedding_forward.1
$region0: #{patch_embedding_forward.1}
  #allocation0 [shape = 'u32[]', space=smem, size = 0x4, offset = 0x4, fixed_abs, tag = 'smem constant byte address 0x4 - core index']
  #allocation1 [shape = 'u32[72,128]{1,0:T(1,128)}', space=vmem, size = 0x9000, scoped, tag = 'internal scratch']
  %s0 = inlined_call_operand.vmem [shape: bf16[12,256], index: 0, kind: input, shape index: {}]
  %s1 = inlined_call_operand.vmem [shape: bf16[256,128], index: 1, kind: input, shape index: {}]
  %s2 = inlined_call_operand.vmem [shape: f32[12,128], index: 2, kind: input, shape index: {}]
  %s3 = inlined_call_operand.vmem [shape: f32[12,128], index: 3, kind: output, shape index: {}]
  %s4 = sld [smem:[#allocation0]]
  $region22: #{patch_embedding_forward.1} parent=0
    _
  %s6 = ssub.s32 1, %s4
  %s7 = scalar_select 0, %s6, %s4
  // Predicated region
  $region2: #{patch_embedding_forward.1} parent=0 // pred_check
    _
  $region3: #{patch_embedding_forward.1} parent=0 // pred_check_branch
    %9 = sbr.rel (0) target = $region5
  $region4: #{patch_embedding_forward.1} parent=0 // pred_region
    _
  $region5: #{patch_embedding_forward.1} parent=0 // pred_fallthru
    _
  // Predicated region
  $region6: #{patch_embedding_forward.1} parent=0 // pred_check
    _
  $region7: #{patch_embedding_forward.1} parent=0 // pred_check_branch
    %11 = sbr.rel (0) target = $region9
  $region8: #{patch_embedding_forward.1} parent=0 // pred_region
    _
  $region9: #{patch_embedding_forward.1} parent=0 // pred_fallthru
    _
  // Predicated region
  $region10: #{patch_embedding_forward.1} parent=0 // pred_check
    _
  $region11: #{patch_embedding_forward.1} parent=0 // pred_check_branch
    %13 = sbr.rel (0) target = $region13
  $region12: #{patch_embedding_forward.1} parent=0 // pred_region
    _
  $region13: #{patch_embedding_forward.1} parent=0 // pred_fallthru
    _
  %v14 = vld [vmem:[%s0] sm:$0xff]
  %v15 = vld [vmem:[%s0 + $0x8] sm:$0x33]
  %v16 = vld [vmem:[%s1] sm:$0xf]
  %v17 = vld [vmem:[%s1 + $0x4] sm:$0xf]
  %v18 = vld [vmem:[%s1 + $0x8] sm:$0xf]
  %v19 = vld [vmem:[%s1 + $0xc] sm:$0xf]
  %v20 = vld [vmem:[%s1 + $0x10] sm:$0xf]
  %v21 = vld [vmem:[%s1 + $0x14] sm:$0xf]
  %v22 = vld [vmem:[%s1 + $0x18] sm:$0xf]
  %v23 = vld [vmem:[%s1 + $0x1c] sm:$0xf]
  %v24 = vld [vmem:[%s1 + $0x20] sm:$0xf]
  %v25 = vld [vmem:[%s1 + $0x24] sm:$0xf]
  %v26 = vld [vmem:[%s1 + $0x28] sm:$0xf]
  %v27 = vld [vmem:[%s1 + $0x2c] sm:$0xf]
  %v28 = vld [vmem:[%s1 + $0x30] sm:$0xf]
  %v29 = vld [vmem:[%s1 + $0x34] sm:$0xf]
  %v30 = vld [vmem:[%s1 + $0x38] sm:$0xf]
  %v31 = vld [vmem:[%s1 + $0x3c] sm:$0xf]
  %v32 = vld [vmem:[%s1 + $0x40] sm:$0xf]
  %v33 = vld [vmem:[%s1 + $0x44] sm:$0xf]
  %v34 = vld [vmem:[%s1 + $0x48] sm:$0xf]
  %v35 = vld [vmem:[%s1 + $0x4c] sm:$0xf]
  %v36 = vld [vmem:[%s1 + $0x50] sm:$0xf]
  %v37 = vld [vmem:[%s1 + $0x54] sm:$0xf]
  %v38 = vld [vmem:[%s1 + $0x58] sm:$0xf]
  %v39 = vld [vmem:[%s1 + $0x5c] sm:$0xf]
  %v40 = vld [vmem:[%s1 + $0x60] sm:$0xf]
  %v41 = vld [vmem:[%s1 + $0x64] sm:$0xf]
  %v42 = vld [vmem:[%s1 + $0x68] sm:$0xf]
  %v43 = vld [vmem:[%s1 + $0x6c] sm:$0xf]
  %v44 = vld [vmem:[%s1 + $0x70] sm:$0xf]
  %v45 = vld [vmem:[%s1 + $0x74] sm:$0xf]
  %v46 = vld [vmem:[%s1 + $0x78] sm:$0xf]
  %v47 = vld [vmem:[%s1 + $0x7c] sm:$0xf]
  %v48 = vld [vmem:[%s2] sm:$0xff]
  %v49 = vld [vmem:[%s2 + $0x8] sm:$0xf]
  %v52 = vunpack.c.l.b16 %v14
  %v53 = vunpack.c.h.b16 %v14
  %v54 = vunpack.c.l.b16 %v15
  %v55 = vunpack.c.h.b16 %v15
  %v56 = vpack.c.b16 %v54, %v52
  %v57 = vpack.c.b16 %v55, %v53
  %v92 = vunpack.c.l.b16 %v16
  %v93 = vunpack.c.l.b16 %v17
  %v94 = vunpack.c.l.b16 %v18
  %v95 = vunpack.c.l.b16 %v19
  %v96 = vunpack.c.l.b16 %v20
  %v97 = vunpack.c.l.b16 %v21
  %v98 = vunpack.c.l.b16 %v22
  %v99 = vunpack.c.l.b16 %v23
  %v100 = vunpack.c.l.b16 %v24
  %v101 = vunpack.c.l.b16 %v25
  %v102 = vunpack.c.l.b16 %v26
  %v103 = vunpack.c.l.b16 %v27
  %v104 = vunpack.c.l.b16 %v28
  %v105 = vunpack.c.l.b16 %v29
  %v106 = vunpack.c.l.b16 %v30
  %v107 = vunpack.c.l.b16 %v31
  %v108 = vunpack.c.l.b16 %v32
  %v109 = vunpack.c.l.b16 %v33
  %v110 = vunpack.c.l.b16 %v34
  %v111 = vunpack.c.l.b16 %v35
  %v112 = vunpack.c.l.b16 %v36
  %v113 = vunpack.c.l.b16 %v37
  %v114 = vunpack.c.l.b16 %v38
  %v115 = vunpack.c.l.b16 %v39
  %v116 = vunpack.c.l.b16 %v40
  %v117 = vunpack.c.l.b16 %v41
  %v118 = vunpack.c.l.b16 %v42
  %v119 = vunpack.c.l.b16 %v43
  %v120 = vunpack.c.l.b16 %v44
  %v121 = vunpack.c.l.b16 %v45
  %v122 = vunpack.c.l.b16 %v46
  %v123 = vunpack.c.l.b16 %v47
  %v124 = vpack.c.b16 %v93, %v92
  %v125 = vpack.c.b16 %v95, %v94
  %v126 = vpack.c.b16 %v97, %v96
  %v127 = vpack.c.b16 %v99, %v98
  %v128 = vpack.c.b16 %v101, %v100
  %v129 = vpack.c.b16 %v103, %v102
  %v130 = vpack.c.b16 %v105, %v104
  %v131 = vpack.c.b16 %v107, %v106
  %v132 = vpack.c.b16 %v109, %v108
  %v133 = vpack.c.b16 %v111, %v110
  %v134 = vpack.c.b16 %v113, %v112
  %v135 = vpack.c.b16 %v115, %v114
  %v136 = vpack.c.b16 %v117, %v116
  %v137 = vpack.c.b16 %v119, %v118
  %v138 = vpack.c.b16 %v121, %v120
  %v139 = vpack.c.b16 %v123, %v122
  %156 = vmatpush.bf16.msra.mxu0 %v131
  %157 = vmatpush.bf16.msra.mxu0 %v130
  %158 = vmatpush.bf16.msra.mxu0 %v129
  %159 = vmatpush.bf16.msra.mxu0 %v128
  %160 = vmatpush.bf16.msra.mxu0 %v127
  %161 = vmatpush.bf16.msra.mxu0 %v126
  %162 = vmatpush.bf16.msra.mxu0 %v125
  %163 = vmatpush.bf16.msra.mxu0 %v124
  %164 = vmatmul.bf16.gmra.mxu0 %v56
  %v165 = vpop.f32.mrf.mxu0
  %v166 = vadd.f32 %v48, %v165
  %v167 = vpop.f32.mrf.mxu0
  %v168 = vadd.f32 %v49, %v167
  %169 = vdwg.mxu0
  %170 = vmatpush.bf16.msra.mxu0 %v139
  %171 = vmatpush.bf16.msra.mxu0 %v138
  %172 = vmatpush.bf16.msra.mxu0 %v137
  %173 = vmatpush.bf16.msra.mxu0 %v136
  %174 = vmatpush.bf16.msra.mxu0 %v135
  %175 = vmatpush.bf16.msra.mxu0 %v134
  %176 = vmatpush.bf16.msra.mxu0 %v133
  %177 = vmatpush.bf16.msra.mxu0 %v132
  %178 = vmatmul.bf16.gmra.mxu0 %v57
  %v179 = vpop.f32.mrf.mxu0
  %v180 = vadd.f32 %v166, %v179
  %v181 = vpop.f32.mrf.mxu0
  %v182 = vadd.f32 %v168, %v181
  %183 = vdwg.mxu0
  %184 = vst [vmem:[%s3] sm:$0xff] %v180
  %185 = vst [vmem:[%s3 + $0x8] sm:$0xf] %v182
  // Predicated region
  $region14: #{patch_embedding_forward.1} parent=0 // pred_check
    _
  $region15: #{patch_embedding_forward.1} parent=0 // pred_check_branch
    %187 = sbr.rel (0) target = $region17
  $region16: #{patch_embedding_forward.1} parent=0 // pred_region
    _
  $region17: #{patch_embedding_forward.1} parent=0 // pred_fallthru
    _
  // Predicated region
  $region18: #{patch_embedding_forward.1} parent=0 // pred_check
    _
  $region19: #{patch_embedding_forward.1} parent=0 // pred_check_branch
    %189 = sbr.rel (0) target = $region21
  $region20: #{patch_embedding_forward.1} parent=0 // pred_region
    _
  $region21: #{patch_embedding_forward.1} parent=0 // pred_fallthru
    _

</llo_original>
